<compile_context>
chip_gen: v6e
topology: v6e:2x2x1
jax: 0.10.0
libtpu: 0.0.40
codegen_flags: <defaults>
</compile_context>

<pallas_src>
import jax
import jax.numpy as jnp
from jax import lax
from jax.experimental import pallas as pl
from jax.experimental.pallas import tpu as pltpu

_LANES = 128
# x (bm, tk) . w (4, tk), contracting the last axis of both -> (bm, 4)
_CONTRACT_LAST = (((1,), (1,)), ((), ()))


def _round_up(n, m):
    return (n + m - 1) // m * m


def _vmem_budget():
    """(tile budget, scoped VMEM limit) derived from this chip's VMEM size."""
    cap = 64 * 1024 * 1024                       # conservative fallback (v7x)
    try:
        cap = int(pltpu.get_tpu_info().vmem_capacity_bytes)
    except Exception:
        pass
    return (cap * 5) // 8, (cap * 3) // 4        # v7x: 40/48 MiB, v5e/v6e: 80/96 MiB


def _pick_bm(B):
    """Batch tile: whole batch for small B, fixed-size tiles for large B."""
    if B <= 256:
        return B
    for cand in (512, 256, 128, 64, 32, 16, 8):
        if B % cand == 0:
            return cand
    return B


def _select_tiles(B, K, budget_bytes, elem_bytes):
    """Pick (bm, tk, nk, k_pad) so double-buffered tiles fit the VMEM budget."""
    bm = _pick_bm(B)
    kp128 = _round_up(K, _LANES)

    def fixed_bytes(bm_):
        w = 2 * 8 * kp128 * elem_bytes        # resident weight (4->8 sublane pad, 2 bufs)
        o = 2 * bm_ * _LANES * 4              # (bm, 4) f32 output block, lane-padded
        b = 2 * 8 * _LANES * 4                # bias block
        return w + o + b

    while True:
        max_tk = (budget_bytes - fixed_bytes(bm)) // (2 * bm * elem_bytes)
        if max_tk >= _LANES:
            break
        half = bm // 2
        if half >= 8 and half % 8 == 0 and B % half == 0:
            bm = half                          # shrink the batch tile, keep the budget
        else:
            max_tk = _LANES                    # smallest lane-aligned K tile
            break

    if K <= max_tk:
        return bm, K, 1, 0                     # whole K resident in one block

    # Prefer a lane-aligned K tile that divides K exactly -> no padding pass.
    tk_cap = (max_tk // _LANES) * _LANES
    for tk in range(tk_cap, 0, -_LANES):
        if K % tk == 0:
            return bm, tk, K // tk, 0

    # Rare fallback: K has no lane-aligned divisor under the budget -> pad.
    tk = tk_cap
    nk = (K + tk - 1) // tk
    return bm, tk, nk, nk * tk - K


def _make_kernel(nk, tk, compute_dtype):
    def kernel(x_ref, w_ref, b_ref, o_ref):
        x = x_ref[...]
        if nk == 1:
            w = w_ref[...]
        else:
            k = pl.program_id(1)
            start = pl.multiple_of(k * tk, _LANES)
            w = w_ref[:, pl.ds(start, tk)]     # weight stays fully VMEM-resident

        if compute_dtype is not None and x.dtype != compute_dtype:
            x = x.astype(compute_dtype)
            w = w.astype(compute_dtype)

        # TODO(synk): with N=4 the MXU output width is ~4/256 utilized; if
        # profiling ever shows the vex/XLU slot binding (per-step weight
        # transposes), switch to a VPU broadcast-multiply + lane-reduce
        # formulation. The kernel is HBM-DMA-bound, so MXU is fine as-is.
        part = lax.dot_general(x, w, _CONTRACT_LAST,
                               preferred_element_type=jnp.float32)
        bias = b_ref[...].astype(jnp.float32)

        if nk == 1:
            o_ref[...] = part + bias
        else:
            k = pl.program_id(1)

            @pl.when(k == 0)
            def _():
                o_ref[...] = jnp.zeros_like(o_ref)

            o_ref[...] += part                 # accumulate into resident f32 output

            @pl.when(k == nk - 1)
            def _():
                o_ref[...] += bias             # fused bias epilogue

    return kernel


def mynet_forward(x_nchw, weight, bias, *, compute_dtype=None):
    """Pallas implementation of Mynet.forward: y = x.view(B, -1) @ W.T + b.

    Args:
      x_nchw: (B, C, H, W) input, any float dtype (kept as-is; no wrapper cast).
      weight: (4, K) weight in PyTorch nn.Linear layout, K = C*H*W.
      bias:   (4,) bias.
      compute_dtype: optional MXU input dtype (e.g. jnp.bfloat16) cast
        per-tile *inside* the kernel; None keeps the input dtype (f32-exact).
    Returns:
      (B, 4) float32 bbox prediction.
    """
    B = x_nchw.shape[0]
    K = 1
    for d in x_nchw.shape[1:]:
        K *= int(d)
    assert weight.shape == (4, K)
    assert bias.shape == (4,)

    x = x_nchw.reshape(B, K)                   # row-major == torch .view(B, -1)
    w = weight
    b2 = bias.reshape(1, 4)

    elem_bytes = jnp.dtype(x.dtype).itemsize
    budget, vmem_limit = _vmem_budget()
    bm, tk, nk, k_pad = _select_tiles(B, K, budget, elem_bytes)

    if k_pad:                                  # rare: no divisor tile available
        x = jnp.pad(x, ((0, 0), (0, k_pad)))
        w = jnp.pad(w, ((0, 0), (0, k_pad)))
    kp = K + k_pad

    grid = (B // bm, nk)
    kernel = _make_kernel(nk, tk, compute_dtype)

    out = pl.pallas_call(
        kernel,
        out_shape=jax.ShapeDtypeStruct((B, 4), jnp.float32),
        grid_spec=pltpu.PrefetchScalarGridSpec(
            num_scalar_prefetch=0,
            grid=grid,
            in_specs=[
                pl.BlockSpec((bm, tk), lambda bi, ki: (bi, ki)),  # x: (batch, K) tiles
                pl.BlockSpec((4, kp), lambda bi, ki: (0, 0)),     # weight: resident
                pl.BlockSpec((1, 4), lambda bi, ki: (0, 0)),      # bias: resident
            ],
            out_specs=pl.BlockSpec((bm, 4), lambda bi, ki: (bi, 0)),
        ),
        compiler_params=pltpu.CompilerParams(
            dimension_semantics=("parallel", "arbitrary"),  # batch parallel, K reduction
            vmem_limit_bytes=vmem_limit,
        ),
    )(x, w, b2)

    # TODO(synk): for very large B a lane-dense (4, B) output slab (compute
    # w @ x.T) avoids masked 4-lane stores; irrelevant at bbox-head batch sizes.
    return out


if __name__ == "__main__":
    # Small synthetic config: NUM_JOINTS = 4, spatial = 16x16
    # => Linear(4*16*16 = 1024, 4), input x: (2, 4, 16, 16) NCHW.
    B, C, H, W = 2, 4, 16, 16
    K = C * H * W

    key = jax.random.PRNGKey(0)
    kx, kw, kb = jax.random.split(key, 3)

    x = jax.random.normal(kx, (B, C, H, W), dtype=jnp.float32)
    bound = 1.0 / (K ** 0.5)                   # nn.Linear default init range
    weight = jax.random.uniform(kw, (4, K), minval=-bound, maxval=bound,
                                dtype=jnp.float32)
    bias = jax.random.uniform(kb, (4,), minval=-bound, maxval=bound,
                              dtype=jnp.float32)

    y = jax.block_until_ready(mynet_forward(x, weight, bias))

    # Pure-JAX f32 reference (HIGHEST precision so the reference itself is not
    # bf16-degraded); tolerance leaves headroom for MXU pass differences.
    y_ref = jnp.dot(x.reshape(B, K), weight.T,
                    precision=lax.Precision.HIGHEST) + bias

    assert y.shape == (B, 4)
    assert jnp.allclose(y, y_ref, atol=5e-3, rtol=5e-3), "mismatch vs reference"

    print("KERNEL_OK")
</pallas_src>

<mosaic_0001>
module attributes {stable_mosaic.version = 11 : i64} {
  func.func @kernel(%arg0: i32, %arg1: i32, %arg2: memref<2x1024xf32, #tpu.memory_space<vmem>>, %arg3: memref<4x1024xf32, #tpu.memory_space<vmem>>, %arg4: memref<1x4xf32, #tpu.memory_space<vmem>>, %arg5: memref<2x4xf32, #tpu.memory_space<vmem>>) attributes {dimension_semantics = [#tpu.dimension_semantics<parallel>, #tpu.dimension_semantics<arbitrary>], iteration_bounds = array<i64: 1, 1>, scalar_prefetch = 0 : i64, scratch_operands = 0 : i64, tpu.core_type = #tpu.core_type<tc>, window_params = [{transform_indices = @transform_0, window_bounds = array<i64: 2, 1024>}, {pipeline_mode = #tpu.pipeline_mode<synchronous>, transform_indices = @transform_1, window_bounds = array<i64: 4, 1024>}, {pipeline_mode = #tpu.pipeline_mode<synchronous>, transform_indices = @transform_2, window_bounds = array<i64: 1, 4>}, {transform_indices = @transform_3, window_bounds = array<i64: 2, 4>}]} {
    %c0 = arith.constant 0 : index
    %c0_0 = arith.constant 0 : index
    %0 = vector.load %arg2[%c0, %c0_0] : memref<2x1024xf32, #tpu.memory_space<vmem>>, vector<2x1024xf32>
    %c0_1 = arith.constant 0 : index
    %c0_2 = arith.constant 0 : index
    %1 = vector.load %arg3[%c0_1, %c0_2] : memref<4x1024xf32, #tpu.memory_space<vmem>>, vector<4x1024xf32>
    %cst = arith.constant dense<0.000000e+00> : vector<2x4xf32>
    %2 = tpu.matmul %0, %1, %cst {dimension_numbers = #tpu.dot_dimension_numbers<[1], [1], [0], [0], [0, 0, 1, 0], [], []>} : vector<2x1024xf32>, vector<4x1024xf32>, vector<2x4xf32> -> vector<2x4xf32>
    %c0_3 = arith.constant 0 : index
    %c0_4 = arith.constant 0 : index
    %3 = vector.load %arg4[%c0_3, %c0_4] : memref<1x4xf32, #tpu.memory_space<vmem>>, vector<1x4xf32>
    %4 = vector.broadcast %3 : vector<1x4xf32> to vector<2x4xf32>
    %5 = arith.addf %2, %4 : vector<2x4xf32>
    %c0_5 = arith.constant 0 : index
    %c0_6 = arith.constant 0 : index
    %6 = vector.load %arg5[%c0_5, %c0_6] : memref<2x4xf32, #tpu.memory_space<vmem>>, vector<2x4xf32>
    tpu.vector_store %arg5[%c0_5, %c0_6], %5 {strides = array<i32>} : memref<2x4xf32, #tpu.memory_space<vmem>>, vector<2x4xf32>,
    return
  }
  func.func @transform_0(%arg0: i32, %arg1: i32) -> (i32, i32) {
    %c0_i32 = arith.constant 0 : i32
    return %arg0, %arg1 : i32, i32
  }
  func.func @transform_1(%arg0: i32, %arg1: i32) -> (i32, i32) {
    %c0_i32 = arith.constant 0 : i32
    %c0_i32_0 = arith.constant 0 : i32
    %c0_i32_1 = arith.constant 0 : i32
    return %c0_i32, %c0_i32_0 : i32, i32
  }
  func.func @transform_2(%arg0: i32, %arg1: i32) -> (i32, i32) {
    %c0_i32 = arith.constant 0 : i32
    %c0_i32_0 = arith.constant 0 : i32
    %c0_i32_1 = arith.constant 0 : i32
    return %c0_i32, %c0_i32_0 : i32, i32
  }
  func.func @transform_3(%arg0: i32, %arg1: i32) -> (i32, i32) {
    %c0_i32 = arith.constant 0 : i32
    %c0_i32_0 = arith.constant 0 : i32
    return %arg0, %c0_i32 : i32, i32
  }
}

</mosaic_0001>

<llo_original>
// kernel: tpu_custom_call.1
$region0: #{tpu_custom_call.1}
  #allocation0 [shape = 'u32[]', space=smem, size = 0x4, offset = 0x4, fixed_abs, tag = 'smem constant byte address 0x4 - core index']
  #allocation1 [shape = 'u32[144,128]{1,0:T(1,128)}', space=vmem, size = 0x12000, scoped, tag = 'internal scratch']
  %s0 = inlined_call_operand.hbm [shape: f32[2,1024], index: 0, kind: input, shape index: {}]
  %s1 = inlined_call_operand.hbm [shape: f32[4,1024], index: 1, kind: input, shape index: {}]
  %s2 = inlined_call_operand.vmem [shape: f32[1,4], index: 2, kind: input, shape index: {}]
  %s3 = inlined_call_operand.hbm [shape: f32[2,4], index: 3, kind: output, shape index: {}]
  %s4 = sld [smem:[#allocation0]]
  $region30: #{tpu_custom_call.1} parent=0
    _
  %s6 = ssub.s32 1, %s4
  %s7 = scalar_select 0, %s6, %s4
  $region1: #{tpu_custom_call.1} parent=0
    #allocation2 [shape = 'u8[8192]{0}', space=vmem, size = 0x2000, scoped, tag = 'input window, operand 0, single buffered']
    #allocation3 [shape = 's32[1]{0}', space=sflag, size = 0x4, scoped, tag = 'scoped memory for tpu_custom_call.1']
    #allocation4 [shape = 's32[1]{0}', space=sflag, size = 0x4, scoped, tag = 'scoped memory for tpu_custom_call.1']
    #allocation5 [shape = 'u8[16384]{0}', space=vmem, size = 0x4000, scoped, tag = 'input window, operand 1, single buffered']
    #allocation6 [shape = 's32[1]{0}', space=sflag, size = 0x4, scoped, tag = 'scoped memory for tpu_custom_call.1']
    #allocation7 [shape = 'u8[1024]{0}', space=vmem, size = 0x400, scoped, tag = 'output window, operand 0, single buffered']
    %8 = vsyncpa [#allocation3], 0
    %9 = vsyncpa [#allocation6], 0
    %10 = vsyncpa [#allocation4], 0
    // Predicated region
    $region2: #{tpu_custom_call.1} parent=1 // pred_check
      _
    $region3: #{tpu_custom_call.1} parent=1 // pred_check_branch
      %12 = sbr.rel (0) target = $region5
    $region4: #{tpu_custom_call.1} parent=1 // pred_region
      %s14 = ssub.s32 256, 256
      %15 = vsyncadd [#allocation3], %s14
      %s17 = sshll.u32 [#allocation2], 4
      %s18 = int_to_ptr.vmem [resolvable:$true] %s17
      %20 = dma.hbm_to_vmem [thread:$0]  %s0, 256, %s18, [#allocation3]
    $region5: #{tpu_custom_call.1} parent=1 // pred_fallthru
      _
    // Predicated region
    $region6: #{tpu_custom_call.1} parent=1 // pred_check
      _
    $region7: #{tpu_custom_call.1} parent=1 // pred_check_branch
      %22 = sbr.rel (0) target = $region9
    $region8: #{tpu_custom_call.1} parent=1 // pred_region
      %s24 = ssub.s32 512, 512
      %25 = vsyncadd [#allocation6], %s24
      %s27 = sshll.u32 [#allocation5], 4
      %s28 = int_to_ptr.vmem [resolvable:$true] %s27
      %30 = dma.hbm_to_vmem [thread:$0]  %s1, 512, %s28, [#allocation6]
    $region9: #{tpu_custom_call.1} parent=1 // pred_fallthru
      _
    // Predicated region
    $region10: #{tpu_custom_call.1} parent=1 // pred_check
      _
    $region11: #{tpu_custom_call.1} parent=1 // pred_check_branch
      %32 = sbr.rel (0) target = $region13
    $region12: #{tpu_custom_call.1} parent=1 // pred_region
      _
    $region13: #{tpu_custom_call.1} parent=1 // pred_fallthru
      _
    // Predicated region
    $region14: #{tpu_custom_call.1} parent=1 // pred_check
      _
    $region15: #{tpu_custom_call.1} parent=1 // pred_check_branch
      %34 = sbr.rel (0) target = $region17
    $region16: #{tpu_custom_call.1} parent=1 // pred_region
      %35 = dma.done [#allocation3], 256
    $region17: #{tpu_custom_call.1} parent=1 // pred_fallthru
      _
    // Predicated region
    $region18: #{tpu_custom_call.1} parent=1 // pred_check
      _
    $region19: #{tpu_custom_call.1} parent=1 // pred_check_branch
      %37 = sbr.rel (0) target = $region21
    $region20: #{tpu_custom_call.1} parent=1 // pred_region
      %38 = dma.done [#allocation6], 512
    $region21: #{tpu_custom_call.1} parent=1 // pred_fallthru
      _
    %v39 = vld [vmem:[#allocation2] sm:$0xff]
    %v40 = vld [vmem:[#allocation2 + $0x8] sm:$0xff]
    %v41 = vld [vmem:[#allocation5] sm:$0xff]
    %v42 = vld [vmem:[#allocation5 + $0x8] sm:$0xff]
    %v43 = vld [vmem:[#allocation5 + $0x10] sm:$0xff]
    %v44 = vld [vmem:[#allocation5 + $0x18] sm:$0xff]
    %v45 = vld [vmem:[%s2] sm:$0x1]
    %v47 = vlaneseq
    %v48 = vshrl.u32 %v47, 7
    %v49 = vsub.s32 0, %v48
    %v50 = vrot.slane %v45, %v49
    %v54 = vcombine.high %v39, %v39
    %v56 = vunpack.c.l.s4 1983009808
    %v57 = vunpack.c.0.s8 %v56
    %v58 = vlaneseq
    %v59 = vshrl.u32 %v58, 7
    %v60 = vsub.s32 %v57, %v59
    %v61 = vrot.slane %v39, %v60
    %v63 = vunpack.c.l.s4 1983009808
    %v64 = vunpack.c.0.s8 %v63
    %v65 = vlaneseq
    %v66 = vshrl.u32 %v65, 7
    %v67 = vsub.s32 %v64, %v66
    %v68 = vrot.slane %v54, %v67
    %v69 = vcombine.high %v61, %v61
    %v70 = vcombine.high %v68, %v68
    %v71 = vcombine.high %v40, %v40
    %v73 = vunpack.c.l.s4 1983009808
    %v74 = vunpack.c.0.s8 %v73
    %v75 = vlaneseq
    %v76 = vshrl.u32 %v75, 7
    %v77 = vsub.s32 %v74, %v76
    %v78 = vrot.slane %v40, %v77
    %v80 = vunpack.c.l.s4 1983009808
    %v81 = vunpack.c.0.s8 %v80
    %v82 = vlaneseq
    %v83 = vshrl.u32 %v82, 7
    %v84 = vsub.s32 %v81, %v83
    %v85 = vrot.slane %v71, %v84
    %v86 = vcombine.high %v78, %v78
    %v87 = vcombine.high %v85, %v85
    %v100 = vcombine.high %v41, %v41
    %v101 = vcombine.high %v42, %v42
    %v102 = vcombine.high %v43, %v43
    %v103 = vcombine.high %v44, %v44
    %108 = vmatprep.subr.mxu0 0.0
    %109 = vmatpush1.xpose.msra.mxu0 0.0
    %110 = vmatprep.subr.mxu0 0.0
    %111 = vmatpush1.xpose.msra.mxu0 0.0
    %112 = vmatprep.subr.mxu0 0.0
    %113 = vmatpush1.xpose.msra.mxu0 0.0
    %114 = vmatprep.subr.mxu0 0.0
    %115 = vmatpush1.xpose.msra.mxu0 0.0
    %116 = vmatprep.subr.mxu0 0.0
    %117 = vmatpush1.xpose.msra.mxu0 0.0
    %118 = vmatprep.subr.mxu0 0.0
    %119 = vmatpush1.xpose.msra.mxu0 0.0
    %120 = vmatprep.subr.mxu0 0.0
    %121 = vmatpush1.xpose.msra.mxu0 0.0
    %122 = vmatprep.subr.mxu0 0.0
    %123 = vmatpush1.xpose.msra.mxu0 0.0
    %124 = vmatprep.subr.mxu0 0.0
    %125 = vmatpush1.xpose.msra.mxu0 0.0
    %126 = vmatprep.subr.mxu0 0.0
    %127 = vmatpush1.xpose.msra.mxu0 0.0
    %128 = vmatprep.subr.mxu0 0.0
    %129 = vmatpush1.xpose.msra.mxu0 0.0
    %130 = vmatprep.subr.mxu0 0.0
    %131 = vmatpush1.xpose.msra.mxu0 0.0
    %132 = vmatprep.subr.mxu0 0.0
    %133 = vmatpush1.xpose.msra.mxu0 0.0
    %134 = vmatprep.subr.mxu0 0.0
    %135 = vmatpush1.xpose.msra.mxu0 0.0
    %136 = vmatprep.subr.mxu0 0.0
    %137 = vmatpush1.xpose.msra.mxu0 0.0
    %138 = vmatprep.subr.mxu0 %v100
    %139 = vmatpush1.xpose.msra.mxu0 %v41
    %140 = vmatprep.subr.mxu0 0.0
    %141 = vmatpush2.xpose.msra.mxu0 0.0
    %142 = vmatprep.subr.mxu0 0.0
    %143 = vmatpush2.xpose.msra.mxu0 0.0
    %144 = vmatprep.subr.mxu0 0.0
    %145 = vmatpush2.xpose.msra.mxu0 0.0
    %146 = vmatprep.subr.mxu0 0.0
    %147 = vmatpush2.xpose.msra.mxu0 0.0
    %148 = vmatprep.subr.mxu0 0.0
    %149 = vmatpush2.xpose.msra.mxu0 0.0
    %150 = vmatprep.subr.mxu0 0.0
    %151 = vmatpush2.xpose.msra.mxu0 0.0
    %152 = vmatprep.subr.mxu0 0.0
    %153 = vmatpush2.xpose.msra.mxu0 0.0
    %154 = vmatprep.subr.mxu0 0.0
    %155 = vmatpush2.xpose.msra.mxu0 0.0
    %156 = vmatprep.subr.mxu0 0.0
    %157 = vmatpush2.xpose.msra.mxu0 0.0
    %158 = vmatprep.subr.mxu0 0.0
    %159 = vmatpush2.xpose.msra.mxu0 0.0
    %160 = vmatprep.subr.mxu0 0.0
    %161 = vmatpush2.xpose.msra.mxu0 0.0
    %162 = vmatprep.subr.mxu0 0.0
    %163 = vmatpush2.xpose.msra.mxu0 0.0
    %164 = vmatprep.subr.mxu0 0.0
    %165 = vmatpush2.xpose.msra.mxu0 0.0
    %166 = vmatprep.subr.mxu0 0.0
    %167 = vmatpush2.xpose.msra.mxu0 0.0
    %168 = vmatprep.subr.mxu0 0.0
    %169 = vmatpush2.xpose.msra.mxu0 0.0
    %170 = vmatprep.subr.mxu0 0.0
    %171 = vmatpush2.xpose.msra.mxu0 0.0
    %172 = vmatprep.mubr.f32.mxu0 %v69
    %173 = vmatmul.mubr.f32.gmra.mxu0 %v61
    %v174 = vpop.f32.mrf.mxu0
    %v175 = vadd.f32 %v50, %v174
    %v176 = vpop.f32.mrf.mxu0
    %177 = vdwg.mxu0
    %178 = vmatprep.subr.mxu0 0.0
    %179 = vmatpush1.xpose.msra.mxu0 0.0
    %180 = vmatprep.subr.mxu0 0.0
    %181 = vmatpush1.xpose.msra.mxu0 0.0
    %182 = vmatprep.subr.mxu0 0.0
    %183 = vmatpush1.xpose.msra.mxu0 0.0
    %184 = vmatprep.subr.mxu0 0.0
    %185 = vmatpush1.xpose.msra.mxu0 0.0
    %186 = vmatprep.subr.mxu0 0.0
    %187 = vmatpush1.xpose.msra.mxu0 0.0
    %188 = vmatprep.subr.mxu0 0.0
    %189 = vmatpush1.xpose.msra.mxu0 0.0
    %190 = vmatprep.subr.mxu0 0.0
    %191 = vmatpush1.xpose.msra.mxu0 0.0
    %192 = vmatprep.subr.mxu0 0.0
    %193 = vmatpush1.xpose.msra.mxu0 0.0
    %194 = vmatprep.subr.mxu0 0.0
    %195 = vmatpush1.xpose.msra.mxu0 0.0
    %196 = vmatprep.subr.mxu0 0.0
    %197 = vmatpush1.xpose.msra.mxu0 0.0
    %198 = vmatprep.subr.mxu0 0.0
    %199 = vmatpush1.xpose.msra.mxu0 0.0
    %200 = vmatprep.subr.mxu0 0.0
    %201 = vmatpush1.xpose.msra.mxu0 0.0
    %202 = vmatprep.subr.mxu0 0.0
    %203 = vmatpush1.xpose.msra.mxu0 0.0
    %204 = vmatprep.subr.mxu0 0.0
    %205 = vmatpush1.xpose.msra.mxu0 0.0
    %206 = vmatprep.subr.mxu0 0.0
    %207 = vmatpush1.xpose.msra.mxu0 0.0
    %208 = vmatprep.subr.mxu0 %v101
    %209 = vmatpush1.xpose.msra.mxu0 %v42
    %210 = vmatprep.subr.mxu0 0.0
    %211 = vmatpush2.xpose.msra.mxu0 0.0
    %212 = vmatprep.subr.mxu0 0.0
    %213 = vmatpush2.xpose.msra.mxu0 0.0
    %214 = vmatprep.subr.mxu0 0.0
    %215 = vmatpush2.xpose.msra.mxu0 0.0
    %216 = vmatprep.subr.mxu0 0.0
    %217 = vmatpush2.xpose.msra.mxu0 0.0
    %218 = vmatprep.subr.mxu0 0.0
    %219 = vmatpush2.xpose.msra.mxu0 0.0
    %220 = vmatprep.subr.mxu0 0.0
    %221 = vmatpush2.xpose.msra.mxu0 0.0
    %222 = vmatprep.subr.mxu0 0.0
    %223 = vmatpush2.xpose.msra.mxu0 0.0
    %224 = vmatprep.subr.mxu0 0.0
    %225 = vmatpush2.xpose.msra.mxu0 0.0
    %226 = vmatprep.subr.mxu0 0.0
    %227 = vmatpush2.xpose.msra.mxu0 0.0
    %228 = vmatprep.subr.mxu0 0.0
    %229 = vmatpush2.xpose.msra.mxu0 0.0
    %230 = vmatprep.subr.mxu0 0.0
    %231 = vmatpush2.xpose.msra.mxu0 0.0
    %232 = vmatprep.subr.mxu0 0.0
    %233 = vmatpush2.xpose.msra.mxu0 0.0
    %234 = vmatprep.subr.mxu0 0.0
    %235 = vmatpush2.xpose.msra.mxu0 0.0
    %236 = vmatprep.subr.mxu0 0.0
    %237 = vmatpush2.xpose.msra.mxu0 0.0
    %238 = vmatprep.subr.mxu0 0.0
    %239 = vmatpush2.xpose.msra.mxu0 0.0
    %240 = vmatprep.subr.mxu0 0.0
    %241 = vmatpush2.xpose.msra.mxu0 0.0
    %242 = vmatprep.mubr.f32.mxu0 %v70
    %243 = vmatmul.mubr.f32.gmra.mxu0 %v68
    %v244 = vpop.f32.mrf.mxu0
    %v245 = vadd.f32 %v175, %v244
    %v246 = vpop.f32.mrf.mxu0
    %247 = vdwg.mxu0
    %248 = vmatprep.subr.mxu0 0.0
    %249 = vmatpush1.xpose.msra.mxu0 0.0
    %250 = vmatprep.subr.mxu0 0.0
    %251 = vmatpush1.xpose.msra.mxu0 0.0
    %252 = vmatprep.subr.mxu0 0.0
    %253 = vmatpush1.xpose.msra.mxu0 0.0
    %254 = vmatprep.subr.mxu0 0.0
    %255 = vmatpush1.xpose.msra.mxu0 0.0
    %256 = vmatprep.subr.mxu0 0.0
    %257 = vmatpush1.xpose.msra.mxu0 0.0
    %258 = vmatprep.subr.mxu0 0.0
    %259 = vmatpush1.xpose.msra.mxu0 0.0
    %260 = vmatprep.subr.mxu0 0.0
    %261 = vmatpush1.xpose.msra.mxu0 0.0
    %262 = vmatprep.subr.mxu0 0.0
    %263 = vmatpush1.xpose.msra.mxu0 0.0
    %264 = vmatprep.subr.mxu0 0.0
    %265 = vmatpush1.xpose.msra.mxu0 0.0
    %266 = vmatprep.subr.mxu0 0.0
    %267 = vmatpush1.xpose.msra.mxu0 0.0
    %268 = vmatprep.subr.mxu0 0.0
    %269 = vmatpush1.xpose.msra.mxu0 0.0
    %270 = vmatprep.subr.mxu0 0.0
    %271 = vmatpush1.xpose.msra.mxu0 0.0
    %272 = vmatprep.subr.mxu0 0.0
    %273 = vmatpush1.xpose.msra.mxu0 0.0
    %274 = vmatprep.subr.mxu0 0.0
    %275 = vmatpush1.xpose.msra.mxu0 0.0
    %276 = vmatprep.subr.mxu0 0.0
    %277 = vmatpush1.xpose.msra.mxu0 0.0
    %278 = vmatprep.subr.mxu0 %v102
    %279 = vmatpush1.xpose.msra.mxu0 %v43
    %280 = vmatprep.subr.mxu0 0.0
    %281 = vmatpush2.xpose.msra.mxu0 0.0
    %282 = vmatprep.subr.mxu0 0.0
    %283 = vmatpush2.xpose.msra.mxu0 0.0
    %284 = vmatprep.subr.mxu0 0.0
    %285 = vmatpush2.xpose.msra.mxu0 0.0
    %286 = vmatprep.subr.mxu0 0.0
    %287 = vmatpush2.xpose.msra.mxu0 0.0
    %288 = vmatprep.subr.mxu0 0.0
    %289 = vmatpush2.xpose.msra.mxu0 0.0
    %290 = vmatprep.subr.mxu0 0.0
    %291 = vmatpush2.xpose.msra.mxu0 0.0
    %292 = vmatprep.subr.mxu0 0.0
    %293 = vmatpush2.xpose.msra.mxu0 0.0
    %294 = vmatprep.subr.mxu0 0.0
    %295 = vmatpush2.xpose.msra.mxu0 0.0
    %296 = vmatprep.subr.mxu0 0.0
    %297 = vmatpush2.xpose.msra.mxu0 0.0
    %298 = vmatprep.subr.mxu0 0.0
    %299 = vmatpush2.xpose.msra.mxu0 0.0
    %300 = vmatprep.subr.mxu0 0.0
    %301 = vmatpush2.xpose.msra.mxu0 0.0
    %302 = vmatprep.subr.mxu0 0.0
    %303 = vmatpush2.xpose.msra.mxu0 0.0
    %304 = vmatprep.subr.mxu0 0.0
    %305 = vmatpush2.xpose.msra.mxu0 0.0
    %306 = vmatprep.subr.mxu0 0.0
    %307 = vmatpush2.xpose.msra.mxu0 0.0
    %308 = vmatprep.subr.mxu0 0.0
    %309 = vmatpush2.xpose.msra.mxu0 0.0
    %310 = vmatprep.subr.mxu0 0.0
    %311 = vmatpush2.xpose.msra.mxu0 0.0
    %312 = vmatprep.mubr.f32.mxu0 %v86
    %313 = vmatmul.mubr.f32.gmra.mxu0 %v78
    %v314 = vpop.f32.mrf.mxu0
    %v315 = vadd.f32 %v245, %v314
    %v316 = vpop.f32.mrf.mxu0
    %317 = vdwg.mxu0
    %318 = vmatprep.subr.mxu0 0.0
    %319 = vmatpush1.xpose.msra.mxu0 0.0
    %320 = vmatprep.subr.mxu0 0.0
    %321 = vmatpush1.xpose.msra.mxu0 0.0
    %322 = vmatprep.subr.mxu0 0.0
    %323 = vmatpush1.xpose.msra.mxu0 0.0
    %324 = vmatprep.subr.mxu0 0.0
    %325 = vmatpush1.xpose.msra.mxu0 0.0
    %326 = vmatprep.subr.mxu0 0.0
    %327 = vmatpush1.xpose.msra.mxu0 0.0
    %328 = vmatprep.subr.mxu0 0.0
    %329 = vmatpush1.xpose.msra.mxu0 0.0
    %330 = vmatprep.subr.mxu0 0.0
    %331 = vmatpush1.xpose.msra.mxu0 0.0
    %332 = vmatprep.subr.mxu0 0.0
    %333 = vmatpush1.xpose.msra.mxu0 0.0
    %334 = vmatprep.subr.mxu0 0.0
    %335 = vmatpush1.xpose.msra.mxu0 0.0
    %336 = vmatprep.subr.mxu0 0.0
    %337 = vmatpush1.xpose.msra.mxu0 0.0
    %338 = vmatprep.subr.mxu0 0.0
    %339 = vmatpush1.xpose.msra.mxu0 0.0
    %340 = vmatprep.subr.mxu0 0.0
    %341 = vmatpush1.xpose.msra.mxu0 0.0
    %342 = vmatprep.subr.mxu0 0.0
    %343 = vmatpush1.xpose.msra.mxu0 0.0
    %344 = vmatprep.subr.mxu0 0.0
    %345 = vmatpush1.xpose.msra.mxu0 0.0
    %346 = vmatprep.subr.mxu0 0.0
    %347 = vmatpush1.xpose.msra.mxu0 0.0
    %348 = vmatprep.subr.mxu0 %v103
    %349 = vmatpush1.xpose.msra.mxu0 %v44
    %350 = vmatprep.subr.mxu0 0.0
    %351 = vmatpush2.xpose.msra.mxu0 0.0
    %352 = vmatprep.subr.mxu0 0.0
    %353 = vmatpush2.xpose.msra.mxu0 0.0
    %354 = vmatprep.subr.mxu0 0.0
    %355 = vmatpush2.xpose.msra.mxu0 0.0
    %356 = vmatprep.subr.mxu0 0.0
    %357 = vmatpush2.xpose.msra.mxu0 0.0
    %358 = vmatprep.subr.mxu0 0.0
    %359 = vmatpush2.xpose.msra.mxu0 0.0
    %360 = vmatprep.subr.mxu0 0.0
    %361 = vmatpush2.xpose.msra.mxu0 0.0
    %362 = vmatprep.subr.mxu0 0.0
    %363 = vmatpush2.xpose.msra.mxu0 0.0
    %364 = vmatprep.subr.mxu0 0.0
    %365 = vmatpush2.xpose.msra.mxu0 0.0
    %366 = vmatprep.subr.mxu0 0.0
    %367 = vmatpush2.xpose.msra.mxu0 0.0
    %368 = vmatprep.subr.mxu0 0.0
    %369 = vmatpush2.xpose.msra.mxu0 0.0
    %370 = vmatprep.subr.mxu0 0.0
    %371 = vmatpush2.xpose.msra.mxu0 0.0
    %372 = vmatprep.subr.mxu0 0.0
    %373 = vmatpush2.xpose.msra.mxu0 0.0
    %374 = vmatprep.subr.mxu0 0.0
    %375 = vmatpush2.xpose.msra.mxu0 0.0
    %376 = vmatprep.subr.mxu0 0.0
    %377 = vmatpush2.xpose.msra.mxu0 0.0
    %378 = vmatprep.subr.mxu0 0.0
    %379 = vmatpush2.xpose.msra.mxu0 0.0
    %380 = vmatprep.subr.mxu0 0.0
    %381 = vmatpush2.xpose.msra.mxu0 0.0
    %382 = vmatprep.mubr.f32.mxu0 %v87
    %383 = vmatmul.mubr.f32.gmra.mxu0 %v85
    %v384 = vpop.f32.mrf.mxu0
    %v385 = vadd.f32 %v315, %v384
    %v386 = vpop.f32.mrf.mxu0
    %387 = vdwg.mxu0
    %vm388 = vcmask 25600
    %389 = vst.msk [vmem:[#allocation7] sm:$0x3] %vm388, %v385
    // Predicated region
    $region22: #{tpu_custom_call.1} parent=1 // pred_check
      _
    $region23: #{tpu_custom_call.1} parent=1 // pred_check_branch
      %391 = sbr.rel (0) target = $region25
    $region24: #{tpu_custom_call.1} parent=1 // pred_region
      %s393 = ssub.s32 32, 32
      %394 = vsyncadd [#allocation4], %s393
      %s396 = sshll.u32 [#allocation7], 4
      %s397 = int_to_ptr.vmem [resolvable:$true] %s396
      %399 = dma.vmem_to_hbm [thread:$0]  %s397, 32, %s3, [#allocation4]
    $region25: #{tpu_custom_call.1} parent=1 // pred_fallthru
      _
    // Predicated region
    $region26: #{tpu_custom_call.1} parent=1 // pred_check
      _
    $region27: #{tpu_custom_call.1} parent=1 // pred_check_branch
      %401 = sbr.rel (0) target = $region29
    $region28: #{tpu_custom_call.1} parent=1 // pred_region
      %402 = dma.done [#allocation4], 32
    $region29: #{tpu_custom_call.1} parent=1 // pred_fallthru
      _
    %403 = vsyncpa [#allocation3], 1
    %404 = vsyncpa [#allocation6], 1
    %405 = vsyncpa [#allocation4], 1

</llo_original>
